<compile_context>
chip_gen: v7x
topology: tpu7x:2x2x1
jax: 0.10.0
libtpu: 0.0.40
codegen_flags: <defaults>
</compile_context>

<pallas_src>
import functools

import jax
import jax.numpy as jnp
from jax.experimental import pallas as pl
from jax.experimental.pallas import tpu as pltpu


# ---------------------------------------------------------------------------
# kernel
# ---------------------------------------------------------------------------
def rmsnorm_kernel(x_ref, g_ref, o_ref, *, scale):
    # x_ref: (TR, D), g_ref: (1, D), o_ref: (TR, D)
    x = x_ref[...]
    xf = x.astype(jnp.float32)

    # F.normalize(x, dim=-1): x / max(||x||_2, 1e-12).
    # Clamp ss at eps^2 and use rsqrt (EUP slot) -> identical semantics,
    # no VALU sqrt + divide. sqrt(D) is folded into the scale.
    ss = jnp.sum(xf * xf, axis=-1, keepdims=True)              # (TR, 1) f32
    inv = scale * jax.lax.rsqrt(jnp.maximum(ss, 1e-24))        # (TR, 1) f32

    if o_ref.dtype == jnp.float32:
        g = g_ref[...].astype(jnp.float32)                     # (1, D)
        o_ref[...] = (xf * inv) * g
    else:
        # bf16 path: keep only the reduction in f32; scale in native dtype so
        # no full f32 copy of the tile stays live for the output.
        g = g_ref[...].astype(x.dtype)                         # (1, D)
        o_ref[...] = ((x * inv.astype(x.dtype)) * g).astype(o_ref.dtype)


# ---------------------------------------------------------------------------
# tiling / VMEM budgeting
# ---------------------------------------------------------------------------
def _vmem_budget():
    """Returns (working_set_budget_bytes, vmem_limit_bytes_or_None, min_grid_steps)."""
    kind = ""
    try:
        kind = jax.devices()[0].device_kind.lower()
    except Exception:
        pass

    phys = None
    try:
        phys = int(pltpu.get_tpu_info().vmem_capacity_bytes)
    except Exception:
        phys = None
    if phys is None:
        if "7" in kind:
            phys = 64 << 20            # v7x: 64 MiB / TensorCore
        elif ("v2" in kind) or ("v3" in kind):
            phys = 32 << 20
        else:
            phys = 128 << 20           # v4/v5e/v5p/v6e

    # v7x has 2 TensorCores: make sure "parallel" has enough grid steps to split.
    min_steps = 4 if "7" in kind else 1

    if phys <= (64 << 20):
        # v7x-class (or small-VMEM parts): keep the whole pipelined set well
        # under physical VMEM and cap the scoped limit below it.
        budget = min(40 << 20, (phys * 5) // 8)
        limit = min(48 << 20, (phys * 3) // 4)
    elif ("v5e" in kind) or ("v5 lite" in kind):
        # v5e: ~820 GB/s HBM; 1-2 MiB tiles already saturate, so a modest
        # budget suffices -- just raise the 16 MiB default scoped limit.
        budget, limit = 32 << 20, 64 << 20
    else:
        # v6e-class (128 MiB physical): big tiles, raised scoped limit.
        budget, limit = 72 << 20, 100 << 20
    return budget, limit, min_steps


def _pick_row_tile(rows, D, in_bytes, out_bytes, budget, min_grid_steps):
    """Largest sublane-aligned row tile whose pipelined working set fits budget."""
    rows_cover = ((rows + 7) // 8) * 8                         # one block covers all rows
    # Working set per row: double-buffered input + output, plus f32 temporaries.
    per_row = D * (2 * in_bytes + 2 * out_bytes + 4)
    tr_budget = max(8, int(budget) // max(per_row, 1))
    # ~8 MiB per input tile is already at HBM roofline; bigger only adds risk.
    tr_cap = max(8, (8 << 20) // max(D * in_bytes, 1))
    tr = min(tr_budget, tr_cap, rows_cover)
    tr = max(8, (tr // 8) * 8)
    # Give the grid a few steps so megacore parallelism (v7x) can split rows.
    while min_grid_steps > 1 and tr > 8 and pl.cdiv(rows, tr) < min_grid_steps:
        tr = max(8, ((tr // 2) // 8) * 8)
    return tr


# ---------------------------------------------------------------------------
# wrapper
# ---------------------------------------------------------------------------
def rmsnorm(x, gamma, *, row_tile=None):
    """RMSNorm over the last axis of x. x: (..., D), gamma: (D,)."""
    orig_shape = x.shape
    D = orig_shape[-1]
    R = 1
    for s in orig_shape[:-1]:
        R *= s

    x2 = x.reshape(R, D)
    g2 = gamma.reshape(1, D)

    budget, vmem_limit, min_steps = _vmem_budget()
    in_bytes = jnp.dtype(x.dtype).itemsize
    out_bytes = in_bytes
    TR = row_tile if row_tile is not None else _pick_row_tile(
        R, D, in_bytes, out_bytes, budget, min_steps)

    grid = (pl.cdiv(R, TR),)   # ragged last block is masked; rows are independent

    kernel = functools.partial(rmsnorm_kernel, scale=float(D) ** 0.5)

    cp_kwargs = dict(dimension_semantics=("parallel",))
    if vmem_limit is not None:
        cp_kwargs["vmem_limit_bytes"] = int(vmem_limit)

    out2 = pl.pallas_call(
        kernel,
        out_shape=jax.ShapeDtypeStruct((R, D), x.dtype),
        grid=grid,
        in_specs=[
            pl.BlockSpec((TR, D), lambda i: (i, 0)),   # x row tile (D lane-dense)
            pl.BlockSpec((1, D), lambda i: (0, 0)),    # gamma, constant index
        ],
        out_specs=pl.BlockSpec((TR, D), lambda i: (i, 0)),
        compiler_params=pltpu.CompilerParams(**cp_kwargs),
    )(x2, g2)

    return out2.reshape(orig_shape)


def _reference(x, gamma):
    xf = x.astype(jnp.float32)
    nrm = jnp.maximum(jnp.linalg.norm(xf, axis=-1, keepdims=True), 1e-12)
    D = x.shape[-1]
    return xf / nrm * (float(D) ** 0.5) * gamma.astype(jnp.float32)


# ---------------------------------------------------------------------------
# main
# ---------------------------------------------------------------------------
if __name__ == "__main__":
    key = jax.random.PRNGKey(0)
    kx, kg, kx2, kg2 = jax.random.split(key, 4)

    # --- test 1: f32, matches the original demo shape (D=32 = full lane extent)
    B, N, D = 2, 8, 32
    x = jax.random.normal(kx, (B, N, D), jnp.float32)
    gamma = 1.0 + 0.1 * jax.random.normal(kg, (D,), jnp.float32)

    out = rmsnorm(x, gamma)
    jax.block_until_ready(out)
    assert out.shape == (B, N, D)
    ref = _reference(x, gamma)
    assert jnp.allclose(out, ref, atol=1e-4, rtol=1e-4), "f32 mismatch vs reference"

    # --- test 2: bf16 + ragged cdiv grid (R=9 rows, TR=8 -> 2 steps, last masked)
    D2 = 128
    x_b = jax.random.normal(kx2, (3, 3, D2), jnp.float32).astype(jnp.bfloat16)
    gamma_b = (1.0 + 0.1 * jax.random.normal(kg2, (D2,), jnp.float32)).astype(jnp.bfloat16)

    out_b = rmsnorm(x_b, gamma_b, row_tile=8)
    jax.block_until_ready(out_b)
    ref_b = _reference(x_b, gamma_b)
    assert jnp.allclose(out_b.astype(jnp.float32), ref_b, atol=5e-2, rtol=5e-2), \
        "bf16 mismatch vs reference"

    print("KERNEL_OK")
</pallas_src>

<mosaic_0001>
module attributes {stable_mosaic.version = 11 : i64} {
  func.func @rmsnorm_kernel(%arg0: i32, %arg1: memref<16x32xf32, #tpu.memory_space<vmem>>, %arg2: memref<1x32xf32, #tpu.memory_space<vmem>>, %arg3: memref<16x32xf32, #tpu.memory_space<vmem>>) attributes {dimension_semantics = [#tpu.dimension_semantics<parallel>], iteration_bounds = array<i64: 1>, scalar_prefetch = 0 : i64, scratch_operands = 0 : i64, tpu.core_type = #tpu.core_type<tc>, window_params = [{transform_indices = @transform_0, window_bounds = array<i64: 16, 32>}, {pipeline_mode = #tpu.pipeline_mode<synchronous>, transform_indices = @transform_1, window_bounds = array<i64: 1, 32>}, {transform_indices = @transform_2, window_bounds = array<i64: 16, 32>}]} {
    %c0 = arith.constant 0 : index
    %c0_0 = arith.constant 0 : index
    %0 = vector.load %arg1[%c0, %c0_0] : memref<16x32xf32, #tpu.memory_space<vmem>>, vector<16x32xf32>
    %1 = arith.mulf %0, %0 : vector<16x32xf32>
    %cst = arith.constant dense<0.000000e+00> : vector<16xf32>
    %2 = vector.multi_reduction <add>, %1, %cst [1] : vector<16x32xf32> to vector<16xf32>
    %3 = vector.shape_cast %2 : vector<16xf32> to vector<16x1xf32>
    %cst_1 = arith.constant 1.000000e-24 : f32
    %4 = vector.broadcast %cst_1 : f32 to vector<16x1xf32>
    %5 = arith.maximumf %3, %4 : vector<16x1xf32>
    %6 = math.rsqrt %5 : vector<16x1xf32>
    %cst_2 = arith.constant 5.65685415 : f32
    %7 = vector.broadcast %cst_2 : f32 to vector<16x1xf32>
    %8 = arith.mulf %7, %6 : vector<16x1xf32>
    %c0_3 = arith.constant 0 : index
    %c0_4 = arith.constant 0 : index
    %9 = vector.load %arg2[%c0_3, %c0_4] : memref<1x32xf32, #tpu.memory_space<vmem>>, vector<1x32xf32>
    %10 = vector.broadcast %8 : vector<16x1xf32> to vector<16x32xf32>
    %11 = arith.mulf %0, %10 : vector<16x32xf32>
    %12 = vector.broadcast %9 : vector<1x32xf32> to vector<16x32xf32>
    %13 = arith.mulf %11, %12 : vector<16x32xf32>
    %c0_5 = arith.constant 0 : index
    %c0_6 = arith.constant 0 : index
    %14 = vector.load %arg3[%c0_5, %c0_6] : memref<16x32xf32, #tpu.memory_space<vmem>>, vector<16x32xf32>
    tpu.vector_store %arg3[%c0_5, %c0_6], %13 {strides = array<i32>} : memref<16x32xf32, #tpu.memory_space<vmem>>, vector<16x32xf32>,
    return
  }
  func.func @transform_0(%arg0: i32) -> (i32, i32) {
    %c0_i32 = arith.constant 0 : i32
    %c0_i32_0 = arith.constant 0 : i32
    return %arg0, %c0_i32 : i32, i32
  }
  func.func @transform_1(%arg0: i32) -> (i32, i32) {
    %c0_i32 = arith.constant 0 : i32
    %c0_i32_0 = arith.constant 0 : i32
    %c0_i32_1 = arith.constant 0 : i32
    return %c0_i32, %c0_i32_0 : i32, i32
  }
  func.func @transform_2(%arg0: i32) -> (i32, i32) {
    %c0_i32 = arith.constant 0 : i32
    %c0_i32_0 = arith.constant 0 : i32
    return %arg0, %c0_i32 : i32, i32
  }
}

</mosaic_0001>

<llo_original>
// kernel: tpu_custom_call.1
$region0: #{tpu_custom_call.1}
  #allocation0 [shape = 'u32[]', space=smem, size = 0x4, offset = 0x4, fixed_abs, tag = 'smem constant byte address 0x4 - core index']
  #allocation1 [shape = 'u32[144,128]{1,0:T(1,128)}', space=vmem, size = 0x12000, scoped, tag = 'internal scratch']
  %s0 = inlined_call_operand.hbm [shape: f32[16,32], index: 0, kind: input, shape index: {}]
  %s1 = inlined_call_operand.hbm [shape: f32[1,32], index: 1, kind: input, shape index: {}]
  %s2 = inlined_call_operand.hbm [shape: f32[16,32], index: 2, kind: output, shape index: {}]
  %s3 = sld [smem:[#allocation0]]
  $region26: #{tpu_custom_call.1} parent=0
    _
  %s5 = ssub.s32 1, %s3
  %s6 = scalar_select 0, %s5, %s3
  $region1: #{tpu_custom_call.1} parent=0
    #allocation2 [shape = 'u8[8192]{0}', space=vmem, size = 0x2000, scoped, tag = 'input window, operand 0, single buffered']
    #allocation3 [shape = 's32[1]{0}', space=sflag, size = 0x4, scoped, tag = 'scoped memory for tpu_custom_call.1']
    #allocation4 [shape = 's32[1]{0}', space=sflag, size = 0x4, scoped, tag = 'scoped memory for tpu_custom_call.1']
    #allocation5 [shape = 'u8[512]{0}', space=vmem, size = 0x400, scoped, tag = 'input window, operand 1, single buffered']
    #allocation6 [shape = 's32[1]{0}', space=sflag, size = 0x4, scoped, tag = 'scoped memory for tpu_custom_call.1']
    #allocation7 [shape = 'u8[8192]{0}', space=vmem, size = 0x2000, scoped, tag = 'output window, operand 0, single buffered']
    %7 = vsyncpa [#allocation3], 0
    %8 = vsyncpa [#allocation6], 0
    %9 = vsyncpa [#allocation4], 0
    // Predicated region
    $region2: #{tpu_custom_call.1} parent=1 // pred_check
      _
    $region3: #{tpu_custom_call.1} parent=1 // pred_check_branch
      %11 = sbr.rel (0) target = $region5
    $region4: #{tpu_custom_call.1} parent=1 // pred_region
      %s13 = ssub.s32 256, 256
      %14 = vsyncadd [#allocation3], %s13
      %s15 = sshll.u32 [#allocation2], 4
      %s16 = int_to_ptr.vmem [resolvable:$true] %s15
      %21 = dma.hbm_to_vmem [thread:$0]  %s0, 256, %s16, [#allocation3], 128, 128, 8
    $region5: #{tpu_custom_call.1} parent=1 // pred_fallthru
      _
    // Predicated region
    $region6: #{tpu_custom_call.1} parent=1 // pred_check
      _
    $region7: #{tpu_custom_call.1} parent=1 // pred_check_branch
      %23 = sbr.rel (0) target = $region9
    $region8: #{tpu_custom_call.1} parent=1 // pred_region
      %s25 = ssub.s32 16, 16
      %26 = vsyncadd [#allocation6], %s25
      %s28 = sshll.u32 [#allocation5], 4
      %s29 = int_to_ptr.vmem [resolvable:$true] %s28
      %31 = dma.hbm_to_vmem [thread:$0]  %s1, 16, %s29, [#allocation6]
    $region9: #{tpu_custom_call.1} parent=1 // pred_fallthru
      _
    // Predicated region
    $region10: #{tpu_custom_call.1} parent=1 // pred_check
      _
    $region11: #{tpu_custom_call.1} parent=1 // pred_check_branch
      %33 = sbr.rel (0) target = $region13
    $region12: #{tpu_custom_call.1} parent=1 // pred_region
      %34 = dma.done [#allocation3], 256
    $region13: #{tpu_custom_call.1} parent=1 // pred_fallthru
      _
    // Predicated region
    $region14: #{tpu_custom_call.1} parent=1 // pred_check
      _
    $region15: #{tpu_custom_call.1} parent=1 // pred_check_branch
      %36 = sbr.rel (0) target = $region17
    $region16: #{tpu_custom_call.1} parent=1 // pred_region
      %37 = dma.done [#allocation6], 16
    $region17: #{tpu_custom_call.1} parent=1 // pred_fallthru
      _
    %v38 = vld [vmem:[#allocation2] sm:$0xff]
    %v39 = vld [vmem:[#allocation2 + $0x8] sm:$0xff]
    %v40 = vmul.f32 %v38, %v38
    %v41 = vmul.f32 %v39, %v39
    %vm42 = vcmask 261120
    %v43 = vsel %vm42, %v40, 0.0
    %44 = vadd.xlane.f32.xlu0 %v43
    %v45 = vpop.xlane.xlu0 %44
    %v46 = vsel %vm42, %v41, 0.0
    %47 = vadd.xlane.f32.xlu0 %v46
    %v48 = vpop.xlane.xlu0 %47
    %v49 = vmax.f32 %v45, 1e-24
    %v50 = vmax.f32 %v48, 1e-24
    %v51 = vrsqrt.pop %v49
    %v52 = vrsqrt.pop %v50
    %v53 = vmul.f32 %v51, 5.656854
    %v54 = vmul.f32 %v52, 5.656854
    %v55 = vld [vmem:[#allocation5] sm:$0x1]
    %v56 = vmul.f32 %v38, %v53
    %v57 = vmul.f32 %v39, %v54
    %v59 = vlaneseq
    %v60 = vshrl.u32 %v59, 7
    %v61 = vsub.s32 0, %v60
    %v62 = vrot.slane %v55, %v61
    %v64 = vmul.f32 %v56, %v62
    %v65 = vmul.f32 %v57, %v62
    %66 = vst.msk [vmem:[#allocation7] sm:$0xff] %vm42, %v64
    %67 = vst.msk [vmem:[#allocation7 + $0x8] sm:$0xff] %vm42, %v65
    // Predicated region
    $region18: #{tpu_custom_call.1} parent=1 // pred_check
      _
    $region19: #{tpu_custom_call.1} parent=1 // pred_check_branch
      %69 = sbr.rel (0) target = $region21
    $region20: #{tpu_custom_call.1} parent=1 // pred_region
      %s71 = ssub.s32 256, 256
      %72 = vsyncadd [#allocation4], %s71
      %s73 = sshll.u32 [#allocation7], 4
      %s74 = int_to_ptr.vmem [resolvable:$true] %s73
      %79 = dma.vmem_to_hbm [thread:$0]  %s74, 256, %s2, [#allocation4], 128, 128, 8
    $region21: #{tpu_custom_call.1} parent=1 // pred_fallthru
      _
    // Predicated region
    $region22: #{tpu_custom_call.1} parent=1 // pred_check
      _
    $region23: #{tpu_custom_call.1} parent=1 // pred_check_branch
      %81 = sbr.rel (0) target = $region25
    $region24: #{tpu_custom_call.1} parent=1 // pred_region
      %82 = dma.done [#allocation4], 256
    $region25: #{tpu_custom_call.1} parent=1 // pred_fallthru
      _
    %83 = vsyncpa [#allocation3], 1
    %84 = vsyncpa [#allocation6], 1
    %85 = vsyncpa [#allocation4], 1

</llo_original>
